<compile_context>
chip_gen: v5e
topology: v5e:2x2
jax: 0.10.0
libtpu: 0.0.40
codegen_flags: <defaults>
</compile_context>

<pallas_src>
import functools

import jax
import jax.numpy as jnp
from jax.experimental import pallas as pl
from jax.experimental.pallas import tpu as pltpu

LANES = 128


def _round_up(x, m):
    return ((x + m - 1) // m) * m


def encoder_kernel(x_ref, w1_ref, b1_ref, w2_ref, b2_ref, o_ref):
    # x_ref:  [TB, input_dim]
    # w1_ref: [input_dim, hidden_dim]       (pre-transposed, constant index_map)
    # b1_ref: [1, hidden_dim]
    # w2_ref: [hidden_dim, out_pad]         (mu|var heads packed + lane-padded)
    # b2_ref: [1, out_pad]
    # o_ref:  [TB, out_pad]                 (lane-dense store, >=128 wide)
    x = x_ref[...]
    h = jnp.dot(x, w1_ref[...], preferred_element_type=jnp.float32) + b1_ref[...]
    h = jnp.maximum(h, 0.0)  # F.relu, kept in f32 on the VPU (v5e-safe)
    out = jnp.dot(h.astype(w2_ref.dtype), w2_ref[...],
                  preferred_element_type=jnp.float32) + b2_ref[...]
    o_ref[...] = out.astype(o_ref.dtype)


def prepare_params(w1, b1, w_mu, b_mu, w_var, b_var, *, compute_dtype=jnp.float32):
    """One-time layout prep (NOT on the per-call hot path).

    PyTorch nn.Linear stores W as [out, in]; the kernel wants [in, out] so the
    hot path is pure `x @ W`.  The mu/var heads are concatenated along the
    output axis and padded to a multiple of 128 lanes so the kernel's output
    store is unmasked / lane-dense.

    compute_dtype: use jnp.bfloat16 on v6e/v7x to halve weight HBM/VMEM traffic
    (accumulation stays f32 inside the kernel); f32 default keeps tight parity
    with the PyTorch reference.
    """
    hidden_dim, _ = w1.shape
    z_dim = int(w_mu.shape[0])
    out_dim = 2 * z_dim
    out_pad = max(LANES, _round_up(out_dim, LANES))

    w1_t = jnp.asarray(w1.T, compute_dtype)                       # [in, hidden]
    b1_row = jnp.asarray(b1, jnp.float32).reshape(1, hidden_dim)  # [1, hidden]

    w2 = jnp.concatenate([w_mu.T, w_var.T], axis=1)               # [hidden, 2*z]
    w2 = jnp.pad(w2, ((0, 0), (0, out_pad - out_dim)))
    w2 = jnp.asarray(w2, compute_dtype)                           # [hidden, out_pad]
    b2 = jnp.concatenate([b_mu, b_var])
    b2 = jnp.pad(b2, (0, out_pad - out_dim))
    b2_row = jnp.asarray(b2, jnp.float32).reshape(1, out_pad)     # [1, out_pad]

    return w1_t, b1_row, w2, b2_row, z_dim


def _choose_batch_tile(batch):
    # Big enough to fill the MXU M dimension / approach HBM roofline, small
    # enough that double-buffered (x-tile + out-tile) + resident weights fit the
    # v7x 64 MiB VMEM budget comfortably.
    if batch <= 256:
        return batch          # single tile == full dim (always a legal block)
    return 256                # multiple of 8; trailing partial tile is masked


@functools.partial(jax.jit, static_argnames=("z_dim",))
def encoder_forward(x, w1, b1, w2, b2, *, z_dim):
    """Returns (z_mu, z_var), matching Encoder.forward semantics."""
    batch, input_dim = x.shape
    hidden_dim = w1.shape[1]
    out_pad = w2.shape[1]

    if x.dtype != w1.dtype:   # no-op for the f32 path, one cast for bf16 path
        x = x.astype(w1.dtype)

    tb = _choose_batch_tile(batch)
    grid = (pl.cdiv(batch, tb),)

    flops = 2 * batch * input_dim * hidden_dim + 2 * batch * hidden_dim * out_pad
    bytes_accessed = (
        x.size * x.dtype.itemsize
        + w1.size * w1.dtype.itemsize + b1.size * b1.dtype.itemsize
        + w2.size * w2.dtype.itemsize + b2.size * b2.dtype.itemsize
        + batch * out_pad * 4
    )

    out = pl.pallas_call(
        encoder_kernel,
        out_shape=jax.ShapeDtypeStruct((batch, out_pad), jnp.float32),
        grid=grid,
        in_specs=[
            pl.BlockSpec((tb, input_dim), lambda i: (i, 0)),          # x tile
            pl.BlockSpec((input_dim, hidden_dim), lambda i: (0, 0)),  # w1 (resident)
            pl.BlockSpec((1, hidden_dim), lambda i: (0, 0)),          # b1 (resident)
            pl.BlockSpec((hidden_dim, out_pad), lambda i: (0, 0)),    # w2 (resident)
            pl.BlockSpec((1, out_pad), lambda i: (0, 0)),             # b2 (resident)
        ],
        out_specs=pl.BlockSpec((tb, out_pad), lambda i: (i, 0)),
        compiler_params=pltpu.CompilerParams(
            dimension_semantics=("parallel",)),
        cost_estimate=pl.CostEstimate(
            flops=flops, transcendentals=0, bytes_accessed=bytes_accessed),
    )(x, w1, b1, w2, b2)

    # Unpack the lane-dense slab back into the two logical heads (fused by jit).
    z_mu = out[:, :z_dim]
    z_var = out[:, z_dim:2 * z_dim]
    return z_mu, z_var


def init_encoder_params(key, input_dim, hidden_dim, z_dim, dtype=jnp.float32):
    """Deterministic PyTorch-style init: U(-1/sqrt(fan_in), 1/sqrt(fan_in))."""
    ks = jax.random.split(key, 6)
    b_in = 1.0 / (input_dim ** 0.5)
    b_h = 1.0 / (hidden_dim ** 0.5)
    w1 = jax.random.uniform(ks[0], (hidden_dim, input_dim), dtype, -b_in, b_in)
    b1 = jax.random.uniform(ks[1], (hidden_dim,), dtype, -b_in, b_in)
    w_mu = jax.random.uniform(ks[2], (z_dim, hidden_dim), dtype, -b_h, b_h)
    b_mu = jax.random.uniform(ks[3], (z_dim,), dtype, -b_h, b_h)
    w_var = jax.random.uniform(ks[4], (z_dim, hidden_dim), dtype, -b_h, b_h)
    b_var = jax.random.uniform(ks[5], (z_dim,), dtype, -b_h, b_h)
    return w1, b1, w_mu, b_mu, w_var, b_var


if __name__ == "__main__":
    # MNIST-flavored but small: batch=64, input=784 (28*28), hidden=128, z=20.
    B, input_dim, hidden_dim, z_dim = 64, 784, 128, 20

    key = jax.random.PRNGKey(0)
    k_x, k_p = jax.random.split(key)
    x = jax.random.normal(k_x, (B, input_dim), jnp.float32)
    raw = init_encoder_params(k_p, input_dim, hidden_dim, z_dim)

    # One-time layout prep (hoisted out of the per-call hot path).
    # Use compute_dtype=jnp.bfloat16 on v6e/v7x for the faster MXU path.
    w1, b1, w2, b2, zd = prepare_params(*raw)

    z_mu, z_var = encoder_forward(x, w1, b1, w2, b2, z_dim=zd)
    z_mu, z_var = jax.block_until_ready((z_mu, z_var))

    # Pure-JAX reference (same math as the PyTorch forward).
    w1_raw, b1_raw, w_mu, b_mu, w_var, b_var = raw
    hidden = jnp.maximum(x @ w1_raw.T + b1_raw, 0.0)
    ref_mu = hidden @ w_mu.T + b_mu
    ref_var = hidden @ w_var.T + b_var

    assert z_mu.shape == (B, z_dim) and z_var.shape == (B, z_dim)
    # Tolerance covers MXU accumulation-order / bf16-pass differences vs XLA dot.
    assert jnp.allclose(z_mu, ref_mu, atol=2e-2, rtol=2e-2)
    assert jnp.allclose(z_var, ref_var, atol=2e-2, rtol=2e-2)

    print("KERNEL_OK")
</pallas_src>

<mosaic_0001>
module attributes {stable_mosaic.version = 11 : i64} {
  func.func @encoder_kernel(%arg0: i32, %arg1: memref<64x784xf32, #tpu.memory_space<vmem>>, %arg2: memref<784x128xf32, #tpu.memory_space<vmem>>, %arg3: memref<1x128xf32, #tpu.memory_space<vmem>>, %arg4: memref<128x128xf32, #tpu.memory_space<vmem>>, %arg5: memref<1x128xf32, #tpu.memory_space<vmem>>, %arg6: memref<64x128xf32, #tpu.memory_space<vmem>>) attributes {dimension_semantics = [#tpu.dimension_semantics<parallel>], iteration_bounds = array<i64: 1>, scalar_prefetch = 0 : i64, scratch_operands = 0 : i64, tpu.core_type = #tpu.core_type<tc>, window_params = [{transform_indices = @transform_0, window_bounds = array<i64: 64, 784>}, {pipeline_mode = #tpu.pipeline_mode<synchronous>, transform_indices = @transform_1, window_bounds = array<i64: 784, 128>}, {pipeline_mode = #tpu.pipeline_mode<synchronous>, transform_indices = @transform_2, window_bounds = array<i64: 1, 128>}, {pipeline_mode = #tpu.pipeline_mode<synchronous>, transform_indices = @transform_3, window_bounds = array<i64: 128, 128>}, {pipeline_mode = #tpu.pipeline_mode<synchronous>, transform_indices = @transform_4, window_bounds = array<i64: 1, 128>}, {transform_indices = @transform_5, window_bounds = array<i64: 64, 128>}]} {
    %c0 = arith.constant 0 : index
    %c0_0 = arith.constant 0 : index
    %0 = vector.load %arg1[%c0, %c0_0] : memref<64x784xf32, #tpu.memory_space<vmem>>, vector<64x784xf32>
    %c0_1 = arith.constant 0 : index
    %c0_2 = arith.constant 0 : index
    %1 = vector.load %arg2[%c0_1, %c0_2] : memref<784x128xf32, #tpu.memory_space<vmem>>, vector<784x128xf32>
    %cst = arith.constant dense<0.000000e+00> : vector<64x128xf32>
    %2 = tpu.matmul %0, %1, %cst {dimension_numbers = #tpu.dot_dimension_numbers<[1], [0], [0], [1], [0, 0, 1, 1], [], []>} : vector<64x784xf32>, vector<784x128xf32>, vector<64x128xf32> -> vector<64x128xf32>
    %c0_3 = arith.constant 0 : index
    %c0_4 = arith.constant 0 : index
    %3 = vector.load %arg3[%c0_3, %c0_4] : memref<1x128xf32, #tpu.memory_space<vmem>>, vector<1x128xf32>
    %4 = vector.broadcast %3 : vector<1x128xf32> to vector<64x128xf32>
    %5 = arith.addf %2, %4 : vector<64x128xf32>
    %cst_5 = arith.constant 0.000000e+00 : f32
    %6 = vector.broadcast %cst_5 : f32 to vector<64x128xf32>
    %7 = arith.maximumf %5, %6 : vector<64x128xf32>
    %c0_6 = arith.constant 0 : index
    %c0_7 = arith.constant 0 : index
    %8 = vector.load %arg4[%c0_6, %c0_7] : memref<128x128xf32, #tpu.memory_space<vmem>>, vector<128x128xf32>
    %cst_8 = arith.constant dense<0.000000e+00> : vector<64x128xf32>
    %9 = tpu.matmul %7, %8, %cst_8 {dimension_numbers = #tpu.dot_dimension_numbers<[1], [0], [0], [1], [0, 0, 1, 1], [], []>} : vector<64x128xf32>, vector<128x128xf32>, vector<64x128xf32> -> vector<64x128xf32>
    %c0_9 = arith.constant 0 : index
    %c0_10 = arith.constant 0 : index
    %10 = vector.load %arg5[%c0_9, %c0_10] : memref<1x128xf32, #tpu.memory_space<vmem>>, vector<1x128xf32>
    %11 = vector.broadcast %10 : vector<1x128xf32> to vector<64x128xf32>
    %12 = arith.addf %9, %11 : vector<64x128xf32>
    %c0_11 = arith.constant 0 : index
    %c0_12 = arith.constant 0 : index
    %13 = vector.load %arg6[%c0_11, %c0_12] : memref<64x128xf32, #tpu.memory_space<vmem>>, vector<64x128xf32>
    tpu.vector_store %arg6[%c0_11, %c0_12], %12 {strides = array<i32>} : memref<64x128xf32, #tpu.memory_space<vmem>>, vector<64x128xf32>,
    return
  }
  func.func @transform_0(%arg0: i32) -> (i32, i32) {
    %c0_i32 = arith.constant 0 : i32
    %c0_i32_0 = arith.constant 0 : i32
    return %arg0, %c0_i32 : i32, i32
  }
  func.func @transform_1(%arg0: i32) -> (i32, i32) {
    %c0_i32 = arith.constant 0 : i32
    %c0_i32_0 = arith.constant 0 : i32
    %c0_i32_1 = arith.constant 0 : i32
    return %c0_i32, %c0_i32_0 : i32, i32
  }
  func.func @transform_2(%arg0: i32) -> (i32, i32) {
    %c0_i32 = arith.constant 0 : i32
    %c0_i32_0 = arith.constant 0 : i32
    %c0_i32_1 = arith.constant 0 : i32
    return %c0_i32, %c0_i32_0 : i32, i32
  }
  func.func @transform_3(%arg0: i32) -> (i32, i32) {
    %c0_i32 = arith.constant 0 : i32
    %c0_i32_0 = arith.constant 0 : i32
    %c0_i32_1 = arith.constant 0 : i32
    return %c0_i32, %c0_i32_0 : i32, i32
  }
  func.func @transform_4(%arg0: i32) -> (i32, i32) {
    %c0_i32 = arith.constant 0 : i32
    %c0_i32_0 = arith.constant 0 : i32
    %c0_i32_1 = arith.constant 0 : i32
    return %c0_i32, %c0_i32_0 : i32, i32
  }
  func.func @transform_5(%arg0: i32) -> (i32, i32) {
    %c0_i32 = arith.constant 0 : i32
    %c0_i32_0 = arith.constant 0 : i32
    return %arg0, %c0_i32 : i32, i32
  }
}

</mosaic_0001>

<llo_original>
// kernel: encoder_forward.1
$region0: #{encoder_forward.1}
  #allocation0 [shape = 'u32[]', space=smem, size = 0x4, offset = 0x4, fixed_abs, tag = 'smem constant byte address 0x4 - core index']
  #allocation1 [shape = 'u32[72,128]{1,0:T(1,128)}', space=vmem, size = 0x9000, scoped, tag = 'internal scratch']
  %s0 = inlined_call_operand.hbm [shape: f32[64,784], index: 0, kind: input, shape index: {}]
  %s1 = inlined_call_operand.hbm [shape: f32[784,128], index: 1, kind: input, shape index: {}]
  %s2 = inlined_call_operand.vmem [shape: f32[1,128], index: 2, kind: input, shape index: {}]
  %s3 = inlined_call_operand.hbm [shape: f32[128,128], index: 3, kind: input, shape index: {}]
  %s4 = inlined_call_operand.vmem [shape: f32[1,128], index: 4, kind: input, shape index: {}]
  %s5 = inlined_call_operand.vmem [shape: f32[64,128], index: 5, kind: output, shape index: {}]
  %s6 = sld [smem:[#allocation0]]
  $region42: #{encoder_forward.1} parent=0
    _
  %s8 = ssub.s32 1, %s6
  %s9 = scalar_select 0, %s8, %s6
  $region1: #{encoder_forward.1} parent=0
    #allocation2 [shape = 'u8[229376]{0}', space=vmem, size = 0x38000, scoped, tag = 'input window, operand 0, single buffered']
    #allocation3 [shape = 's32[1]{0}', space=sflag, size = 0x4, scoped, tag = 'scoped memory for encoder_forward.1']
    #allocation4 [shape = 'u8[401408]{0}', space=vmem, size = 0x62000, scoped, tag = 'input window, operand 1, single buffered']
    #allocation5 [shape = 's32[1]{0}', space=sflag, size = 0x4, scoped, tag = 'scoped memory for encoder_forward.1']
    #allocation6 [shape = 'u8[65536]{0}', space=vmem, size = 0x10000, scoped, tag = 'input window, operand 3, single buffered']
    %10 = vsyncpa [#allocation3], 0
    %11 = vsyncpa [#allocation5], 0
    // Predicated region
    $region2: #{encoder_forward.1} parent=1 // pred_check
      _
    $region3: #{encoder_forward.1} parent=1 // pred_check_branch
      %13 = sbr.rel (0) target = $region5
    $region4: #{encoder_forward.1} parent=1 // pred_region
      %15 = vsyncadd [#allocation3], 0
      %s16 = sshll.u32 %s0, 4
      %s17 = int_to_ptr.hbm [resolvable:$true] %s16
      %s18 = sshll.u32 [#allocation2], 4
      %s19 = int_to_ptr.vmem [resolvable:$true] %s18
      %24 = dma.hbm_to_vmem [thread:$0]  %s17, 7168, %s19, [#allocation3], 896, 896, 56
    $region5: #{encoder_forward.1} parent=1 // pred_fallthru
      _
    // Predicated region
    $region6: #{encoder_forward.1} parent=1 // pred_check
      _
    $region7: #{encoder_forward.1} parent=1 // pred_check_branch
      %26 = sbr.rel (0) target = $region9
    $region8: #{encoder_forward.1} parent=1 // pred_region
      %28 = vsyncadd [#allocation5], 0
      %s29 = sshll.u32 %s1, 4
      %s30 = int_to_ptr.hbm [resolvable:$true] %s29
      %s31 = sshll.u32 [#allocation4], 4
      %s32 = int_to_ptr.vmem [resolvable:$true] %s31
      %37 = dma.hbm_to_vmem [thread:$0]  %s30, 12544, %s32, [#allocation5], 128, 128, 8
    $region9: #{encoder_forward.1} parent=1 // pred_fallthru
      _
    // Predicated region
    $region10: #{encoder_forward.1} parent=1 // pred_check
      _
    $region11: #{encoder_forward.1} parent=1 // pred_check_branch
      %39 = sbr.rel (0) target = $region13
    $region12: #{encoder_forward.1} parent=1 // pred_region
      _
    $region13: #{encoder_forward.1} parent=1 // pred_fallthru
      _
    // Predicated region
    $region14: #{encoder_forward.1} parent=1 // pred_check
      _
    $region15: #{encoder_forward.1} parent=1 // pred_check_branch
      %41 = sbr.rel (0) target = $region17
    $region16: #{encoder_forward.1} parent=1 // pred_region
      %43 = vsyncadd [#allocation5], 0
      %s44 = sshll.u32 %s3, 4
      %s45 = int_to_ptr.hbm [resolvable:$true] %s44
      %s46 = sshll.u32 [#allocation6], 4
      %s47 = int_to_ptr.vmem [resolvable:$true] %s46
      %52 = dma.hbm_to_vmem [thread:$0]  %s45, 2048, %s47, [#allocation5], 128, 128, 8
    $region17: #{encoder_forward.1} parent=1 // pred_fallthru
      _
    // Predicated region
    $region18: #{encoder_forward.1} parent=1 // pred_check
      _
    $region19: #{encoder_forward.1} parent=1 // pred_check_branch
      %54 = sbr.rel (0) target = $region21
    $region20: #{encoder_forward.1} parent=1 // pred_region
      _
    $region21: #{encoder_forward.1} parent=1 // pred_fallthru
      _
    // Predicated region
    $region22: #{encoder_forward.1} parent=1 // pred_check
      _
    $region23: #{encoder_forward.1} parent=1 // pred_check_branch
      %56 = sbr.rel (0) target = $region25
    $region24: #{encoder_forward.1} parent=1 // pred_region
      %58 = dma.done [#allocation3], 7168
    $region25: #{encoder_forward.1} parent=1 // pred_fallthru
      _
    // Predicated region
    $region26: #{encoder_forward.1} parent=1 // pred_check
      _
    $region27: #{encoder_forward.1} parent=1 // pred_check_branch
      %60 = sbr.rel (0) target = $region29
    $region28: #{encoder_forward.1} parent=1 // pred_region
      %62 = dma.done [#allocation5], 12544
    $region29: #{encoder_forward.1} parent=1 // pred_fallthru
      _
    // Predicated region
    $region30: #{encoder_forward.1} parent=1 // pred_check
      _
    $region31: #{encoder_forward.1} parent=1 // pred_check_branch
      %64 = sbr.rel (0) target = $region33
    $region32: #{encoder_forward.1} parent=1 // pred_region
      %66 = dma.done [#allocation5], 2048
    $region33: #{encoder_forward.1} parent=1 // pred_fallthru
      _
    %v67 = vld [vmem:[#allocation2] sm:$0xff]
    %v68 = vld [vmem:[#allocation2 + $0x8] sm:$0xff]
    %v69 = vld [vmem:[#allocation2 + $0x10] sm:$0xff]
    %v70 = vld [vmem:[#allocation2 + $0x18] sm:$0xff]
    %v71 = vld [vmem:[#allocation2 + $0x20] sm:$0xff]
    %v72 = vld [vmem:[#allocation2 + $0x28] sm:$0xff]
    %v73 = vld [vmem:[#allocation2 + $0x30] sm:$0xff]
    %v74 = vld [vmem:[#allocation2 + $0x38] sm:$0xff]
    %v75 = vld [vmem:[#allocation2 + $0x40] sm:$0xff]
    %v76 = vld [vmem:[#allocation2 + $0x48] sm:$0xff]
    %v77 = vld [vmem:[#allocation2 + $0x50] sm:$0xff]
    %v78 = vld [vmem:[#allocation2 + $0x58] sm:$0xff]
    %v79 = vld [vmem:[#allocation2 + $0x60] sm:$0xff]
    %v80 = vld [vmem:[#allocation2 + $0x68] sm:$0xff]
    %v81 = vld [vmem:[#allocation2 + $0x70] sm:$0xff]
    %v82 = vld [vmem:[#allocation2 + $0x78] sm:$0xff]
    %v83 = vld [vmem:[#allocation2 + $0x80] sm:$0xff]
    %v84 = vld [vmem:[#allocation2 + $0x88] sm:$0xff]
    %v85 = vld [vmem:[#allocation2 + $0x90] sm:$0xff]
    %v86 = vld [vmem:[#allocation2 + $0x98] sm:$0xff]
    %v87 = vld [vmem:[#allocation2 + $0xa0] sm:$0xff]
    %v88 = vld [vmem:[#allocation2 + $0xa8] sm:$0xff]
    %v89 = vld [vmem:[#allocation2 + $0xb0] sm:$0xff]
    %v90 = vld [vmem:[#allocation2 + $0xb8] sm:$0xff]
    %v91 = vld [vmem:[#allocation2 + $0xc0] sm:$0xff]
    %v92 = vld [vmem:[#allocation2 + $0xc8] sm:$0xff]
    %v93 = vld [vmem:[#allocation2 + $0xd0] sm:$0xff]
    %v94 = vld [vmem:[#allocation2 + $0xd8] sm:$0xff]
    %v95 = vld [vmem:[#allocation2 + $0xe0] sm:$0xff]
    %v96 = vld [vmem:[#allocation2 + $0xe8] sm:$0xff]
    %v97 = vld [vmem:[#allocation2 + $0xf0] sm:$0xff]
    %v98 = vld [vmem:[#allocation2 + $0xf8] sm:$0xff]
    %v99 = vld [vmem:[#allocation2 + $0x100] sm:$0xff]
    %v100 = vld [vmem:[#allocation2 + $0x108] sm:$0xff]
    %v101 = vld [vmem:[#allocation2 + $0x110] sm:$0xff]
    %v102 = vld [vmem:[#allocation2 + $0x118] sm:$0xff]
    %v103 = vld [vmem:[#allocation2 + $0x120] sm:$0xff]
    %v104 = vld [vmem:[#allocation2 + $0x128] sm:$0xff]
    %v105 = vld [vmem:[#allocation2 + $0x130] sm:$0xff]
    %v106 = vld [vmem:[#allocation2 + $0x138] sm:$0xff]
    %v107 = vld [vmem:[#allocation2 + $0x140] sm:$0xff]
    %v108 = vld [vmem:[#allocation2 + $0x148] sm:$0xff]
    %v109 = vld [vmem:[#allocation2 + $0x150] sm:$0xff]
    %v110 = vld [vmem:[#allocation2 + $0x158] sm:$0xff]
    %v111 = vld [vmem:[#allocation2 + $0x160] sm:$0xff]
    %v112 = vld [vmem:[#allocation2 + $0x168] sm:$0xff]
    %v113 = vld [vmem:[#allocation2 + $0x170] sm:$0xff]
    %v114 = vld [vmem:[#allocation2 + $0x178] sm:$0xff]
    %v115 = vld [vmem:[#allocation2 + $0x180] sm:$0xff]
    %v116 = vld [vmem:[#allocation2 + $0x188] sm:$0xff]
    %v117 = vld [vmem:[#allocation2 + $0x190] sm:$0xff]
    %v118 = vld [vmem:[#allocation2 + $0x198] sm:$0xff]
    %v119 = vld [vmem:[#allocation2 + $0x1a0] sm:$0xff]
    %v120 = vld [vmem:[#allocation2 + $0x1a8] sm:$0xff]
    %v121 = vld [vmem:[#allocation2 + $0x1b0] sm:$0xff]
    %v122 = vld [vmem:[#allocation2 + $0x1b8] sm:$0xff]
    %v123 = vld [vmem:[#allocation4] sm:$0xff]
    %v124 = vld [vmem:[#allocation4 + $0x8] sm:$0xff]
    %v125 = vld [vmem:[#allocation4 + $0x10] sm:$0xff]
    %v126 = vld [vmem:[#allocation4 + $0x18] sm:$0xff]
    %v127 = vld [vmem:[#allocation4 + $0x20] sm:$0xff]
    %v128 = vld [vmem:[#allocation4 + $0x28] sm:$0xff]
    %v129 = vld [vmem:[#allocation4 + $0x30] sm:$0xff]
    %v130 = vld [vmem:[#allocation4 + $0x38] sm:$0xff]
    %v131 = vld [vmem:[#allocation4 + $0x40] sm:$0xff]
    %v132 = vld [vmem:[#allocation4 + $0x48] sm:$0xff]
    %v133 = vld [vmem:[#allocation4 + $0x50] sm:$0xff]
    %v134 = vld [vmem:[#allocation4 + $0x58] sm:$0xff]
    %v135 = vld [vmem:[#allocation4 + $0x60] sm:$0xff]
    %v136 = vld [vmem:[#allocation4 + $0x68] sm:$0xff]
    %v137 = vld [vmem:[#allocation4 + $0x70] sm:$0xff]
    %v138 = vld [vmem:[#allocation4 + $0x78] sm:$0xff]
    %v139 = vld [vmem:[#allocation4 + $0x80] sm:$0xff]
    %v140 = vld [vmem:[#allocation4 + $0x88] sm:$0xff]
    %v141 = vld [vmem:[#allocation4 + $0x90] sm:$0xff]
    %v142 = vld [vmem:[#allocation4 + $0x98] sm:$0xff]
    %v143 = vld [vmem:[#allocation4 + $0xa0] sm:$0xff]
    %v144 = vld [vmem:[#allocation4 + $0xa8] sm:$0xff]
    %v145 = vld [vmem:[#allocation4 + $0xb0] sm:$0xff]
    %v146 = vld [vmem:[#allocation4 + $0xb8] sm:$0xff]
    %v147 = vld [vmem:[#allocation4 + $0xc0] sm:$0xff]
    %v148 = vld [vmem:[#allocation4 + $0xc8] sm:$0xff]
    %v149 = vld [vmem:[#allocation4 + $0xd0] sm:$0xff]
    %v150 = vld [vmem:[#allocation4 + $0xd8] sm:$0xff]
    %v151 = vld [vmem:[#allocation4 + $0xe0] sm:$0xff]
    %v152 = vld [vmem:[#allocation4 + $0xe8] sm:$0xff]
    %v153 = vld [vmem:[#allocation4 + $0xf0] sm:$0xff]
    %v154 = vld [vmem:[#allocation4 + $0xf8] sm:$0xff]
    %v155 = vld [vmem:[#allocation4 + $0x100] sm:$0xff]
    %v156 = vld [vmem:[#allocation4 + $0x108] sm:$0xff]
    %v157 = vld [vmem:[#allocation4 + $0x110] sm:$0xff]
    %v158 = vld [vmem:[#allocation4 + $0x118] sm:$0xff]
    %v159 = vld [vmem:[#allocation4 + $0x120] sm:$0xff]
    %v160 = vld [vmem:[#allocation4 + $0x128] sm:$0xff]
    %v161 = vld [vmem:[#allocation4 + $0x130] sm:$0xff]
    %v162 = vld [vmem:[#allocation4 + $0x138] sm:$0xff]
    %v163 = vld [vmem:[#allocation4 + $0x140] sm:$0xff]
    %v164 = vld [vmem:[#allocation4 + $0x148] sm:$0xff]
    %v165 = vld [vmem:[#allocation4 + $0x150] sm:$0xff]
    %v166 = vld [vmem:[#allocation4 + $0x158] sm:$0xff]
    %v167 = vld [vmem:[#allocation4 + $0x160] sm:$0xff]
    %v168 = vld [vmem:[#allocation4 + $0x168] sm:$0xff]
    %v169 = vld [vmem:[#allocation4 + $0x170] sm:$0xff]
    %v170 = vld [vmem:[#allocation4 + $0x178] sm:$0xff]
    %v171 = vld [vmem:[#allocation4 + $0x180] sm:$0xff]
    %v172 = vld [vmem:[#allocation4 + $0x188] sm:$0xff]
    %v173 = vld [vmem:[#allocation4 + $0x190] sm:$0xff]
    %v174 = vld [vmem:[#allocation4 + $0x198] sm:$0xff]
    %v175 = vld [vmem:[#allocation4 + $0x1a0] sm:$0xff]
    %v176 = vld [vmem:[#allocation4 + $0x1a8] sm:$0xff]
    %v177 = vld [vmem:[#allocation4 + $0x1b0] sm:$0xff]
    %v178 = vld [vmem:[#allocation4 + $0x1b8] sm:$0xff]
    %v179 = vld [vmem:[#allocation4 + $0x1c0] sm:$0xff]
    %v180 = vld [vmem:[#allocation4 + $0x1c8] sm:$0xff]
    %v181 = vld [vmem:[#allocation4 + $0x1d0] sm:$0xff]
    %v182 = vld [vmem:[#allocation4 + $0x1d8] sm:$0xff]
    %v183 = vld [vmem:[#allocation4 + $0x1e0] sm:$0xff]
    %v184 = vld [vmem:[#allocation4 + $0x1e8] sm:$0xff]
    %v185 = vld [vmem:[#allocation4 + $0x1f0] sm:$0xff]
    %v186 = vld [vmem:[#allocation4 + $0x1f8] sm:$0xff]
    %v187 = vld [vmem:[#allocation4 + $0x200] sm:$0xff]
    %v188 = vld [vmem:[#allocation4 + $0x208] sm:$0xff]
    %v189 = vld [vmem:[#allocation4 + $0x210] sm:$0xff]
    %v190 = vld [vmem:[#allocation4 + $0x218] sm:$0xff]
    %v191 = vld [vmem:[#allocation4 + $0x220] sm:$0xff]
    %v192 = vld [vmem:[#allocation4 + $0x228] sm:$0xff]
    %v193 = vld [vmem:[#allocation4 + $0x230] sm:$0xff]
    %v194 = vld [vmem:[#allocation4 + $0x238] sm:$0xff]
    %v195 = vld [vmem:[#allocation4 + $0x240] sm:$0xff]
    %v196 = vld [vmem:[#allocation4 + $0x248] sm:$0xff]
    %v197 = vld [vmem:[#allocation4 + $0x250] sm:$0xff]
    %v198 = vld [vmem:[#allocation4 + $0x258] sm:$0xff]
    %v199 = vld [vmem:[#allocation4 + $0x260] sm:$0xff]
    %v200 = vld [vmem:[#allocation4 + $0x268] sm:$0xff]
    %v201 = vld [vmem:[#allocation4 + $0x270] sm:$0xff]
    %v202 = vld [vmem:[#allocation4 + $0x278] sm:$0xff]
    %v203 = vld [vmem:[#allocation4 + $0x280] sm:$0xff]
    %v204 = vld [vmem:[#allocation4 + $0x288] sm:$0xff]
    %v205 = vld [vmem:[#allocation4 + $0x290] sm:$0xff]
    %v206 = vld [vmem:[#allocation4 + $0x298] sm:$0xff]
    %v207 = vld [vmem:[#allocation4 + $0x2a0] sm:$0xff]
    %v208 = vld [vmem:[#allocation4 + $0x2a8] sm:$0xff]
    %v209 = vld [vmem:[#allocation4 + $0x2b0] sm:$0xff]
    %v210 = vld [vmem:[#allocation4 + $0x2b8] sm:$0xff]
    %v211 = vld [vmem:[#allocation4 + $0x2c0] sm:$0xff]
    %v212 = vld [vmem:[#allocation4 + $0x2c8] sm:$0xff]
    %v213 = vld [vmem:[#allocation4 + $0x2d0] sm:$0xff]
    %v214 = vld [vmem:[#allocation4 + $0x2d8] sm:$0xff]
    %v215 = vld [vmem:[#allocation4 + $0x2e0] sm:$0xff]
    %v216 = vld [vmem:[#allocation4 + $0x2e8] sm:$0xff]
    %v217 = vld [vmem:[#allocation4 + $0x2f0] sm:$0xff]
    %v218 = vld [vmem:[#allocation4 + $0x2f8] sm:$0xff]
    %v219 = vld [vmem:[#allocation4 + $0x300] sm:$0xff]
    %v220 = vld [vmem:[#allocation4 + $0x308] sm:$0xff]
    %v221 = vld [vmem:[%s2] sm:$0x1]
    %v223 = vperm.slane %v221, 0
    %vm225 = vcmask 130048
    %v227 = vsel %vm225, %v73, 0
    %v230 = vsel %vm225, %v80, 0
    %v233 = vsel %vm225, %v87, 0
    %v236 = vsel %vm225, %v94, 0
    %v239 = vsel %vm225, %v101, 0
    %v242 = vsel %vm225, %v108, 0
    %v245 = vsel %vm225, %v115, 0
    %v248 = vsel %vm225, %v122, 0
    %250 = vmatpush.msra.mxu0 %v138
    %251 = vmatpush.msra.mxu0 %v137
    %252 = vmatpush.msra.mxu0 %v136
    %253 = vmatpush.msra.mxu0 %v135
    %254 = vmatpush.msra.mxu0 %v134
    %255 = vmatpush.msra.mxu0 %v133
    %256 = vmatpush.msra.mxu0 %v132
    %257 = vmatpush.msra.mxu0 %v131
    %258 = vmatpush.msra.mxu0 %v130
    %259 = vmatpush.msra.mxu0 %v129
    %260 = vmatpush.msra.mxu0 %v128
    %261 = vmatpush.msra.mxu0 %v127
    %262 = vmatpush.msra.mxu0 %v126
    %263 = vmatpush.msra.mxu0 %v125
    %264 = vmatpush.msra.mxu0 %v124
    %265 = vmatpush.msra.mxu0 %v123
    %266 = vmatmul.f32.gmra.mxu0 %v67
    %v267 = vpop.f32.mrf.mxu0
    %v268 = vadd.f32 %v223, %v267
    %269 = vmatmul.f32.gmra.mxu0 %v74
    %v270 = vpop.f32.mrf.mxu0
    %v271 = vadd.f32 %v223, %v270
    %272 = vmatmul.f32.gmra.mxu0 %v81
    %v273 = vpop.f32.mrf.mxu0
    %v274 = vadd.f32 %v223, %v273
    %275 = vmatmul.f32.gmra.mxu0 %v88
    %v276 = vpop.f32.mrf.mxu0
    %v277 = vadd.f32 %v223, %v276
    %278 = vmatmul.f32.gmra.mxu0 %v95
    %v279 = vpop.f32.mrf.mxu0
    %v280 = vadd.f32 %v223, %v279
    %281 = vmatmul.f32.gmra.mxu0 %v102
    %v282 = vpop.f32.mrf.mxu0
    %v283 = vadd.f32 %v223, %v282
    %284 = vmatmul.f32.gmra.mxu0 %v109
    %v285 = vpop.f32.mrf.mxu0
    %v286 = vadd.f32 %v223, %v285
    %287 = vmatmul.f32.gmra.mxu0 %v116
    %v288 = vpop.f32.mrf.mxu0
    %v289 = vadd.f32 %v223, %v288
    %290 = vdwg.mxu0
    %291 = vmatpush.msra.mxu0 %v154
    %292 = vmatpush.msra.mxu0 %v153
    %293 = vmatpush.msra.mxu0 %v152
    %294 = vmatpush.msra.mxu0 %v151
    %295 = vmatpush.msra.mxu0 %v150
    %296 = vmatpush.msra.mxu0 %v149
    %297 = vmatpush.msra.mxu0 %v148
    %298 = vmatpush.msra.mxu0 %v147
    %299 = vmatpush.msra.mxu0 %v146
    %300 = vmatpush.msra.mxu0 %v145
    %301 = vmatpush.msra.mxu0 %v144
    %302 = vmatpush.msra.mxu0 %v143
    %303 = vmatpush.msra.mxu0 %v142
    %304 = vmatpush.msra.mxu0 %v141
    %305 = vmatpush.msra.mxu0 %v140
    %306 = vmatpush.msra.mxu0 %v139
    %307 = vmatmul.f32.gmra.mxu0 %v68
    %v308 = vpop.f32.mrf.mxu0
    %v309 = vadd.f32 %v268, %v308
    %310 = vmatmul.f32.gmra.mxu0 %v75
    %v311 = vpop.f32.mrf.mxu0
    %v312 = vadd.f32 %v271, %v311
    %313 = vmatmul.f32.gmra.mxu0 %v82
    %v314 = vpop.f32.mrf.mxu0
    %v315 = vadd.f32 %v274, %v314
    %316 = vmatmul.f32.gmra.mxu0 %v89
    %v317 = vpop.f32.mrf.mxu0
    %v318 = vadd.f32 %v277, %v317
    %319 = vmatmul.f32.gmra.mxu0 %v96
    %v320 = vpop.f32.mrf.mxu0
    %v321 = vadd.f32 %v280, %v320
    %322 = vmatmul.f32.gmra.mxu0 %v103
    %v323 = vpop.f32.mrf.mxu0
    %v324 = vadd.f32 %v283, %v323
    %325 = vmatmul.f32.gmra.mxu0 %v110
    %v326 = vpop.f32.mrf.mxu0
    %v327 = vadd.f32 %v286, %v326
    %328 = vmatmul.f32.gmra.mxu0 %v117
    %v329 = vpop.f32.mrf.mxu0
    %v330 = vadd.f32 %v289, %v329
    %331 = vdwg.mxu0
    %332 = vmatpush.msra.mxu0 %v170
    %333 = vmatpush.msra.mxu0 %v169
    %334 = vmatpush.msra.mxu0 %v168
    %335 = vmatpush.msra.mxu0 %v167
    %336 = vmatpush.msra.mxu0 %v166
    %337 = vmatpush.msra.mxu0 %v165
    %338 = vmatpush.msra.mxu0 %v164
    %339 = vmatpush.msra.mxu0 %v163
    %340 = vmatpush.msra.mxu0 %v162
    %341 = vmatpush.msra.mxu0 %v161
    %342 = vmatpush.msra.mxu0 %v160
    %343 = vmatpush.msra.mxu0 %v159
    %344 = vmatpush.msra.mxu0 %v158
    %345 = vmatpush.msra.mxu0 %v157
    %346 = vmatpush.msra.mxu0 %v156
    %347 = vmatpush.msra.mxu0 %v155
    %348 = vmatmul.f32.gmra.mxu0 %v69
    %v349 = vpop.f32.mrf.mxu0
    %v350 = vadd.f32 %v309, %v349
    %351 = vmatmul.f32.gmra.mxu0 %v76
    %v352 = vpop.f32.mrf.mxu0
    %v353 = vadd.f32 %v312, %v352
    %354 = vmatmul.f32.gmra.mxu0 %v83
    %v355 = vpop.f32.mrf.mxu0
    %v356 = vadd.f32 %v315, %v355
    %357 = vmatmul.f32.gmra.mxu0 %v90
    %v358 = vpop.f32.mrf.mxu0
    %v359 = vadd.f32 %v318, %v358
    %360 = vmatmul.f32.gmra.mxu0 %v97
    %v361 = vpop.f32.mrf.mxu0
    %v362 = vadd.f32 %v321, %v361
    %363 = vmatmul.f32.gmra.mxu0 %v104
    %v364 = vpop.f32.mrf.mxu0
    %v365 = vadd.f32 %v324, %v364
    %366 = vmatmul.f32.gmra.mxu0 %v111
    %v367 = vpop.f32.mrf.mxu0
    %v368 = vadd.f32 %v327, %v367
    %369 = vmatmul.f32.gmra.mxu0 %v118
    %v370 = vpop.f32.mrf.mxu0
    %v371 = vadd.f32 %v330, %v370
    %372 = vdwg.mxu0
    %373 = vmatpush.msra.mxu0 %v186
    %374 = vmatpush.msra.mxu0 %v185
    %375 = vmatpush.msra.mxu0 %v184
    %376 = vmatpush.msra.mxu0 %v183
    %377 = vmatpush.msra.mxu0 %v182
    %378 = vmatpush.msra.mxu0 %v181
    %379 = vmatpush.msra.mxu0 %v180
    %380 = vmatpush.msra.mxu0 %v179
    %381 = vmatpush.msra.mxu0 %v178
    %382 = vmatpush.msra.mxu0 %v177
    %383 = vmatpush.msra.mxu0 %v176
    %384 = vmatpush.msra.mxu0 %v175
    %385 = vmatpush.msra.mxu0 %v174
    %386 = vmatpush.msra.mxu0 %v173
    %387 = vmatpush.msra.mxu0 %v172
    %388 = vmatpush.msra.mxu0 %v171
    %389 = vmatmul.f32.gmra.mxu0 %v70
    %v390 = vpop.f32.mrf.mxu0
    %v391 = vadd.f32 %v350, %v390
    %392 = vmatmul.f32.gmra.mxu0 %v77
    %v393 = vpop.f32.mrf.mxu0
    %v394 = vadd.f32 %v353, %v393
    %395 = vmatmul.f32.gmra.mxu0 %v84
    %v396 = vpop.f32.mrf.mxu0
    %v397 = vadd.f32 %v356, %v396
    %398 = vmatmul.f32.gmra.mxu0 %v91
    %v399 = vpop.f32.mrf.mxu0
    %v400 = vadd.f32 %v359, %v399
    %401 = vmatmul.f32.gmra.mxu0 %v98
    %v402 = vpop.f32.mrf.mxu0
    %v403 = vadd.f32 %v362, %v402
    %404 = vmatmul.f32.gmra.mxu0 %v105
    %v405 = vpop.f32.mrf.mxu0
    %v406 = vadd.f32 %v365, %v405
    %407 = vmatmul.f32.gmra.mxu0 %v112
    %v408 = vpop.f32.mrf.mxu0
    %v409 = vadd.f32 %v368, %v408
    %410 = vmatmul.f32.gmra.mxu0 %v119
    %v411 = vpop.f32.mrf.mxu0
    %v412 = vadd.f32 %v371, %v411
    %413 = vdwg.mxu0
    %414 = vmatpush.msra.mxu0 %v202
    %415 = vmatpush.msra.mxu0 %v201
    %416 = vmatpush.msra.mxu0 %v200
    %417 = vmatpush.msra.mxu0 %v199
    %418 = vmatpush.msra.mxu0 %v198
    %419 = vmatpush.msra.mxu0 %v197
    %420 = vmatpush.msra.mxu0 %v196
    %421 = vmatpush.msra.mxu0 %v195
    %422 = vmatpush.msra.mxu0 %v194
    %423 = vmatpush.msra.mxu0 %v193
    %424 = vmatpush.msra.mxu0 %v192
    %425 = vmatpush.msra.mxu0 %v191
    %426 = vmatpush.msra.mxu0 %v190
    %427 = vmatpush.msra.mxu0 %v189
    %428 = vmatpush.msra.mxu0 %v188
    %429 = vmatpush.msra.mxu0 %v187
    %430 = vmatmul.f32.gmra.mxu0 %v71
    %v431 = vpop.f32.mrf.mxu0
    %v432 = vadd.f32 %v391, %v431
    %433 = vmatmul.f32.gmra.mxu0 %v78
    %v434 = vpop.f32.mrf.mxu0
    %v435 = vadd.f32 %v394, %v434
    %436 = vmatmul.f32.gmra.mxu0 %v85
    %v437 = vpop.f32.mrf.mxu0
    %v438 = vadd.f32 %v397, %v437
    %439 = vmatmul.f32.gmra.mxu0 %v92
    %v440 = vpop.f32.mrf.mxu0
    %v441 = vadd.f32 %v400, %v440
    %442 = vmatmul.f32.gmra.mxu0 %v99
    %v443 = vpop.f32.mrf.mxu0
    %v444 = vadd.f32 %v403, %v443
    %445 = vmatmul.f32.gmra.mxu0 %v106
    %v446 = vpop.f32.mrf.mxu0
    %v447 = vadd.f32 %v406, %v446
    %448 = vmatmul.f32.gmra.mxu0 %v113
    %v449 = vpop.f32.mrf.mxu0
    %v450 = vadd.f32 %v409, %v449
    %451 = vmatmul.f32.gmra.mxu0 %v120
    %v452 = vpop.f32.mrf.mxu0
    %v453 = vadd.f32 %v412, %v452
    %454 = vdwg.mxu0
    %455 = vmatpush.msra.mxu0 %v218
    %456 = vmatpush.msra.mxu0 %v217
    %457 = vmatpush.msra.mxu0 %v216
    %458 = vmatpush.msra.mxu0 %v215
    %459 = vmatpush.msra.mxu0 %v214
    %460 = vmatpush.msra.mxu0 %v213
    %461 = vmatpush.msra.mxu0 %v212
    %462 = vmatpush.msra.mxu0 %v211
    %463 = vmatpush.msra.mxu0 %v210
    %464 = vmatpush.msra.mxu0 %v209
    %465 = vmatpush.msra.mxu0 %v208
    %466 = vmatpush.msra.mxu0 %v207
    %467 = vmatpush.msra.mxu0 %v206
    %468 = vmatpush.msra.mxu0 %v205
    %469 = vmatpush.msra.mxu0 %v204
    %470 = vmatpush.msra.mxu0 %v203
    %471 = vmatmul.f32.gmra.mxu0 %v72
    %v472 = vpop.f32.mrf.mxu0
    %v473 = vadd.f32 %v432, %v472
    %474 = vmatmul.f32.gmra.mxu0 %v79
    %v475 = vpop.f32.mrf.mxu0
    %v476 = vadd.f32 %v435, %v475
    %477 = vmatmul.f32.gmra.mxu0 %v86
    %v478 = vpop.f32.mrf.mxu0
    %v479 = vadd.f32 %v438, %v478
    %480 = vmatmul.f32.gmra.mxu0 %v93
    %v481 = vpop.f32.mrf.mxu0
    %v482 = vadd.f32 %v441, %v481
    %483 = vmatmul.f32.gmra.mxu0 %v100
    %v484 = vpop.f32.mrf.mxu0
    %v485 = vadd.f32 %v444, %v484
    %486 = vmatmul.f32.gmra.mxu0 %v107
    %v487 = vpop.f32.mrf.mxu0
    %v488 = vadd.f32 %v447, %v487
    %489 = vmatmul.f32.gmra.mxu0 %v114
    %v490 = vpop.f32.mrf.mxu0
    %v491 = vadd.f32 %v450, %v490
    %492 = vmatmul.f32.gmra.mxu0 %v121
    %v493 = vpop.f32.mrf.mxu0
    %v494 = vadd.f32 %v453, %v493
    %495 = vdwg.mxu0
    %496 = vmatpush.msra.mxu0 0.0
    %497 = vmatpush.msra.mxu0 0.0
    %498 = vmatpush.msra.mxu0 0.0
    %499 = vmatpush.msra.mxu0 0.0
    %500 = vmatpush.msra.mxu0 0.0
    %501 = vmatpush.msra.mxu0 0.0
    %502 = vmatpush.msra.mxu0 0.0
    %503 = vmatpush.msra.mxu0 0.0
    %504 = vmatpush.msra.mxu0 0.0
    %505 = vmatpush.msra.mxu0 0.0
    %506 = vmatpush.msra.mxu0 0.0
    %507 = vmatpush.msra.mxu0 0.0
    %508 = vmatpush.msra.mxu0 0.0
    %509 = vmatpush.msra.mxu0 0.0
    %510 = vmatpush.msra.mxu0 %v220
    %511 = vmatpush.msra.mxu0 %v219
    %512 = vmatmul.f32.gmra.mxu0 %v227
    %v513 = vpop.f32.mrf.mxu0
    %v514 = vadd.f32 %v473, %v513
    %515 = vmatmul.f32.gmra.mxu0 %v230
    %v516 = vpop.f32.mrf.mxu0
    %v517 = vadd.f32 %v476, %v516
    %518 = vmatmul.f32.gmra.mxu0 %v233
    %v519 = vpop.f32.mrf.mxu0
    %v520 = vadd.f32 %v479, %v519
    %521 = vmatmul.f32.gmra.mxu0 %v236
    %v522 = vpop.f32.mrf.mxu0
    %v523 = vadd.f32 %v482, %v522
    %524 = vmatmul.f32.gmra.mxu0 %v239
    %v525 = vpop.f32.mrf.mxu0
    %v526 = vadd.f32 %v485, %v525
    %527 = vmatmul.f32.gmra.mxu0 %v242
    %v528 = vpop.f32.mrf.mxu0
    %v529 = vadd.f32 %v488, %v528
    %530 = vmatmul.f32.gmra.mxu0 %v245
    %v531 = vpop.f32.mrf.mxu0
    %v532 = vadd.f32 %v491, %v531
    %533 = vmatmul.f32.gmra.mxu0 %v248
    %v534 = vpop.f32.mrf.mxu0
    %v535 = vadd.f32 %v494, %v534
    %536 = vdwg.mxu0
    %v537 = vmax.f32 %v514, 0.0
    %v538 = vmax.f32 %v517, 0.0
    %v539 = vmax.f32 %v520, 0.0
    %v540 = vmax.f32 %v523, 0.0
    %v541 = vmax.f32 %v526, 0.0
    %v542 = vmax.f32 %v529, 0.0
    %v543 = vmax.f32 %v532, 0.0
    %v544 = vmax.f32 %v535, 0.0
    %v545 = vld [vmem:[#allocation6] sm:$0xff]
    %v546 = vld [vmem:[#allocation6 + $0x8] sm:$0xff]
    %v547 = vld [vmem:[#allocation6 + $0x10] sm:$0xff]
    %v548 = vld [vmem:[#allocation6 + $0x18] sm:$0xff]
    %v549 = vld [vmem:[#allocation6 + $0x20] sm:$0xff]
    %v550 = vld [vmem:[#allocation6 + $0x28] sm:$0xff]
    %v551 = vld [vmem:[#allocation6 + $0x30] sm:$0xff]
    %v552 = vld [vmem:[#allocation6 + $0x38] sm:$0xff]
    %v553 = vld [vmem:[#allocation6 + $0x40] sm:$0xff]
    %v554 = vld [vmem:[#allocation6 + $0x48] sm:$0xff]
    %v555 = vld [vmem:[#allocation6 + $0x50] sm:$0xff]
    %v556 = vld [vmem:[#allocation6 + $0x58] sm:$0xff]
    %v557 = vld [vmem:[#allocation6 + $0x60] sm:$0xff]
    %v558 = vld [vmem:[#allocation6 + $0x68] sm:$0xff]
    %v559 = vld [vmem:[#allocation6 + $0x70] sm:$0xff]
    %v560 = vld [vmem:[#allocation6 + $0x78] sm:$0xff]
    %v561 = vld [vmem:[%s4] sm:$0x1]
    %v563 = vperm.slane %v561, 0
    %565 = vmatpush.msra.mxu0 %v560
    %566 = vmatpush.msra.mxu0 %v559
    %567 = vmatpush.msra.mxu0 %v558
    %568 = vmatpush.msra.mxu0 %v557
    %569 = vmatpush.msra.mxu0 %v556
    %570 = vmatpush.msra.mxu0 %v555
    %571 = vmatpush.msra.mxu0 %v554
    %572 = vmatpush.msra.mxu0 %v553
    %573 = vmatpush.msra.mxu0 %v552
    %574 = vmatpush.msra.mxu0 %v551
    %575 = vmatpush.msra.mxu0 %v550
    %576 = vmatpush.msra.mxu0 %v549
    %577 = vmatpush.msra.mxu0 %v548
    %578 = vmatpush.msra.mxu0 %v547
    %579 = vmatpush.msra.mxu0 %v546
    %580 = vmatpush.msra.mxu0 %v545
    %581 = vmatmul.f32.gmra.mxu0 %v537
    %v582 = vpop.f32.mrf.mxu0
    %v583 = vadd.f32 %v563, %v582
    %584 = vmatmul.f32.gmra.mxu0 %v538
    %v585 = vpop.f32.mrf.mxu0
    %v586 = vadd.f32 %v563, %v585
    %587 = vmatmul.f32.gmra.mxu0 %v539
    %v588 = vpop.f32.mrf.mxu0
    %v589 = vadd.f32 %v563, %v588
    %590 = vmatmul.f32.gmra.mxu0 %v540
    %v591 = vpop.f32.mrf.mxu0
    %v592 = vadd.f32 %v563, %v591
    %593 = vmatmul.f32.gmra.mxu0 %v541
    %v594 = vpop.f32.mrf.mxu0
    %v595 = vadd.f32 %v563, %v594
    %596 = vmatmul.f32.gmra.mxu0 %v542
    %v597 = vpop.f32.mrf.mxu0
    %v598 = vadd.f32 %v563, %v597
    %599 = vmatmul.f32.gmra.mxu0 %v543
    %v600 = vpop.f32.mrf.mxu0
    %v601 = vadd.f32 %v563, %v600
    %602 = vmatmul.f32.gmra.mxu0 %v544
    %v603 = vpop.f32.mrf.mxu0
    %v604 = vadd.f32 %v563, %v603
    %605 = vdwg.mxu0
    %606 = vst [vmem:[%s5] sm:$0xff] %v583
    %607 = vst [vmem:[%s5 + $0x8] sm:$0xff] %v586
    %608 = vst [vmem:[%s5 + $0x10] sm:$0xff] %v589
    %609 = vst [vmem:[%s5 + $0x18] sm:$0xff] %v592
    %610 = vst [vmem:[%s5 + $0x20] sm:$0xff] %v595
    %611 = vst [vmem:[%s5 + $0x28] sm:$0xff] %v598
    %612 = vst [vmem:[%s5 + $0x30] sm:$0xff] %v601
    %613 = vst [vmem:[%s5 + $0x38] sm:$0xff] %v604
    // Predicated region
    $region34: #{encoder_forward.1} parent=1 // pred_check
      _
    $region35: #{encoder_forward.1} parent=1 // pred_check_branch
      %615 = sbr.rel (0) target = $region37
    $region36: #{encoder_forward.1} parent=1 // pred_region
      _
    $region37: #{encoder_forward.1} parent=1 // pred_fallthru
      _
    // Predicated region
    $region38: #{encoder_forward.1} parent=1 // pred_check
      _
    $region39: #{encoder_forward.1} parent=1 // pred_check_branch
      %617 = sbr.rel (0) target = $region41
    $region40: #{encoder_forward.1} parent=1 // pred_region
      _
    $region41: #{encoder_forward.1} parent=1 // pred_fallthru
      _
    %618 = vsyncpa [#allocation3], 1
    %619 = vsyncpa [#allocation5], 1

</llo_original>
